<compile_context>
chip_gen: v6e
topology: v6e:2x2x1
jax: 0.10.0
libtpu: 0.0.40
codegen_flags: <defaults>
</compile_context>

<pallas_src>
import math

import jax
import jax.numpy as jnp
from jax.experimental import pallas as pl
from jax.experimental.pallas import tpu as pltpu


def const_embedding_kernel(pe_ref, o_ref):
    """One grid step writes a (block_n, block_lane) tile of the output.

    pe_ref: VMEM (1, block_lane)        -- positional-embedding slab (pre-cast).
    o_ref : VMEM (block_n, block_lane)  -- lane-dense output tile.
    """
    # src (zeros) + pe  ==  pe broadcast over the batch rows (sublane
    # broadcast with a replicated layout, then full-width vst).
    o_ref[...] = jnp.broadcast_to(pe_ref[...], o_ref.shape)


def const_embedding(z, emb_weight, *, seq_len, d_model, block_n=None,
                    force_pallas=False):
    """z: (N, ...) -- only N and dtype matter (matches torch `z.new_zeros`).
    emb_weight: (max_path, d_model) float32 embedding table.
    Returns (N, seq_len, d_model); dtype follows torch promotion of z.dtype
    with the embedding weight dtype.
    """
    N = z.shape[0]
    out_dtype = jnp.result_type(z.dtype, emb_weight.dtype)
    itemsize = jnp.dtype(out_dtype).itemsize
    lane_w = seq_len * d_model

    # ---- Small-problem fast path: pallas_call fixed overhead dwarfs the copy.
    if (not force_pallas) and N * lane_w * itemsize <= (1 << 20):
        pe = emb_weight[:seq_len].astype(out_dtype)
        return jnp.broadcast_to(pe, (N, seq_len, d_model))

    # ---- Lane-dense slab, padded so every store is a full-width vst.
    lane_w_pad = lane_w if lane_w % 128 == 0 else (-(-lane_w // 128) * 128)
    pe_flat = emb_weight[:seq_len].astype(out_dtype).reshape(1, lane_w)
    if lane_w_pad != lane_w:
        pe_flat = jnp.pad(pe_flat, ((0, 0), (0, lane_w_pad - lane_w)))

    # ---- VMEM-budgeted tiling: ~4 MiB output tile -> ~8 MiB double-buffered,
    #      safe on v5e (16 MiB scoped default), v6e and v7x (64 MiB physical).
    target_tile_bytes = 4 << 20

    # Lane blocking: whole (padded) row if it fits with >= 8 rows per tile;
    # otherwise tile lanes in multiples of 128.
    max_lane_block = max(128, (target_tile_bytes // (8 * itemsize)) // 128 * 128)
    block_lane = lane_w_pad if lane_w_pad <= max_lane_block else max_lane_block

    # Row blocking under the byte budget.
    rows_budget = max(8, (target_tile_bytes // (block_lane * itemsize)) // 8 * 8)
    if block_n is None:
        block_n = N if N <= rows_budget else rows_budget
    else:
        block_n = min(block_n, N)
        if block_n != N:
            block_n = max(8, (block_n // 8) * 8)

    # Megacore: for big single-block problems split the row axis in two so
    # both TensorCores (v7x) get write work.
    if block_n == N and N > 8 and N * lane_w_pad * itemsize > (2 << 20):
        half = -(-((N + 1) // 2) // 8) * 8
        block_n = min(block_n, half)

    grid = (pl.cdiv(N, block_n), pl.cdiv(lane_w_pad, block_lane))

    cost = pl.CostEstimate(
        flops=0,
        transcendentals=0,
        bytes_accessed=N * lane_w_pad * itemsize + lane_w_pad * itemsize,
    )

    out_flat = pl.pallas_call(
        const_embedding_kernel,
        out_shape=jax.ShapeDtypeStruct((N, lane_w_pad), out_dtype),
        grid=grid,
        in_specs=[
            # Tiny slab; block index constant along the row axis (stays resident).
            pl.BlockSpec((1, block_lane), lambda i, j: (0, j)),
        ],
        out_specs=pl.BlockSpec((block_n, block_lane), lambda i, j: (i, j)),
        compiler_params=pltpu.CompilerParams(
            dimension_semantics=("parallel", "parallel"),
        ),
        cost_estimate=cost,
    )(pe_flat)

    # Layout plumbing only: strip lane padding, back to (N, seq_len, d_model).
    if lane_w_pad != lane_w:
        out_flat = out_flat[:, :lane_w]
    return out_flat.reshape(N, seq_len, d_model)


if __name__ == "__main__":
    # Small config consistent with the module:
    #   cfg.batch_size = 2, cfg.max_path (seq_len) = 8, cfg.d_model = 32
    batch_size = 2
    seq_len = 8          # max_path
    d_model = 32

    key = jax.random.PRNGKey(0)
    k_w, k_z = jax.random.split(key)

    # nn.init.kaiming_normal_(weight, mode='fan_in'):
    #   gain = sqrt(2), fan_in = d_model, std = sqrt(2 / d_model)
    std = math.sqrt(2.0 / d_model)
    emb_weight = jax.random.normal(k_w, (seq_len, d_model), jnp.float32) * std

    # z: only z.shape[0] and z.dtype matter for the forward pass.
    z = jax.random.normal(k_z, (batch_size, 4, 16, 16), jnp.float32)

    N = z.shape[0]
    out_dtype = jnp.result_type(z.dtype, emb_weight.dtype)
    ref = jnp.broadcast_to(emb_weight[:seq_len], (N, seq_len, d_model)).astype(out_dtype)

    # 1) Shipped config, forced through the Pallas kernel.
    out = const_embedding(z, emb_weight, seq_len=seq_len, d_model=d_model,
                          force_pallas=True)
    out = jax.block_until_ready(out)
    assert out.shape == (N, seq_len, d_model)
    assert out.dtype == out_dtype
    assert jnp.allclose(out, ref, atol=1e-6), "mismatch vs reference (shipped config)"

    # 2) Ragged-edge case: N not a multiple of block_n (exercises edge masking).
    N_big = 300
    z_big = jnp.zeros((N_big, 4), jnp.float32)
    out_big = const_embedding(z_big, emb_weight, seq_len=seq_len, d_model=d_model,
                              block_n=128, force_pallas=True)
    out_big = jax.block_until_ready(out_big)
    ref_big = jnp.broadcast_to(emb_weight[:seq_len], (N_big, seq_len, d_model))
    assert jnp.allclose(out_big, ref_big, atol=1e-6), "mismatch vs reference (ragged N)"

    # 3) Small-problem fast path (plain XLA broadcast, no pallas_call).
    out_fast = jax.block_until_ready(
        const_embedding(z, emb_weight, seq_len=seq_len, d_model=d_model))
    assert jnp.allclose(out_fast, ref, atol=1e-6), "mismatch vs reference (fast path)"

    print("KERNEL_OK")
</pallas_src>

<mosaic_0001>
module attributes {stable_mosaic.version = 11 : i64} {
  func.func @const_embedding_kernel(%arg0: i32, %arg1: i32, %arg2: memref<1x256xf32, #tpu.memory_space<vmem>>, %arg3: memref<2x256xf32, #tpu.memory_space<vmem>>) attributes {dimension_semantics = [#tpu.dimension_semantics<parallel>, #tpu.dimension_semantics<parallel>], iteration_bounds = array<i64: 1, 1>, scalar_prefetch = 0 : i64, scratch_operands = 0 : i64, tpu.core_type = #tpu.core_type<tc>, window_params = [{transform_indices = @transform_0, window_bounds = array<i64: 1, 256>}, {transform_indices = @transform_1, window_bounds = array<i64: 2, 256>}]} {
    %c0 = arith.constant 0 : index
    %c0_0 = arith.constant 0 : index
    %0 = vector.load %arg2[%c0, %c0_0] : memref<1x256xf32, #tpu.memory_space<vmem>>, vector<1x256xf32>
    %1 = vector.shape_cast %0 : vector<1x256xf32> to vector<1x256xf32>
    %2 = vector.broadcast %1 : vector<1x256xf32> to vector<2x256xf32>
    %c0_1 = arith.constant 0 : index
    %c0_2 = arith.constant 0 : index
    %3 = vector.load %arg3[%c0_1, %c0_2] : memref<2x256xf32, #tpu.memory_space<vmem>>, vector<2x256xf32>
    tpu.vector_store %arg3[%c0_1, %c0_2], %2 {strides = array<i32>} : memref<2x256xf32, #tpu.memory_space<vmem>>, vector<2x256xf32>,
    return
  }
  func.func @transform_0(%arg0: i32, %arg1: i32) -> (i32, i32) {
    %c0_i32 = arith.constant 0 : i32
    %c0_i32_0 = arith.constant 0 : i32
    return %c0_i32, %arg1 : i32, i32
  }
  func.func @transform_1(%arg0: i32, %arg1: i32) -> (i32, i32) {
    %c0_i32 = arith.constant 0 : i32
    return %arg0, %arg1 : i32, i32
  }
}

</mosaic_0001>

<llo_original>
// kernel: tpu_custom_call.1
$region0: #{tpu_custom_call.1}
  #allocation0 [shape = 'u32[]', space=smem, size = 0x4, offset = 0x4, fixed_abs, tag = 'smem constant byte address 0x4 - core index']
  #allocation1 [shape = 'u32[144,128]{1,0:T(1,128)}', space=vmem, size = 0x12000, scoped, tag = 'internal scratch']
  %s0 = inlined_call_operand.hbm [shape: f32[1,256], index: 0, kind: input, shape index: {}]
  %s1 = inlined_call_operand.hbm [shape: f32[2,256], index: 1, kind: output, shape index: {}]
  %s2 = sld [smem:[#allocation0]]
  $region18: #{tpu_custom_call.1} parent=0
    _
  %s4 = ssub.s32 1, %s2
  %s5 = scalar_select 0, %s4, %s2
  $region1: #{tpu_custom_call.1} parent=0
    #allocation2 [shape = 'u8[1024]{0}', space=vmem, size = 0x400, scoped, tag = 'input window, operand 0, single buffered']
    #allocation3 [shape = 's32[1]{0}', space=sflag, size = 0x4, scoped, tag = 'scoped memory for tpu_custom_call.1']
    #allocation4 [shape = 's32[1]{0}', space=sflag, size = 0x4, scoped, tag = 'scoped memory for tpu_custom_call.1']
    #allocation5 [shape = 'u8[2048]{0}', space=vmem, size = 0x800, scoped, tag = 'output window, operand 0, single buffered']
    %6 = vsyncpa [#allocation3], 0
    %7 = vsyncpa [#allocation4], 0
    // Predicated region
    $region2: #{tpu_custom_call.1} parent=1 // pred_check
      _
    $region3: #{tpu_custom_call.1} parent=1 // pred_check_branch
      %9 = sbr.rel (0) target = $region5
    $region4: #{tpu_custom_call.1} parent=1 // pred_region
      %s11 = ssub.s32 32, 32
      %12 = vsyncadd [#allocation3], %s11
      %s14 = sshll.u32 [#allocation2], 4
      %s15 = int_to_ptr.vmem [resolvable:$true] %s14
      %17 = dma.hbm_to_vmem [thread:$0]  %s0, 32, %s15, [#allocation3]
    $region5: #{tpu_custom_call.1} parent=1 // pred_fallthru
      _
    // Predicated region
    $region6: #{tpu_custom_call.1} parent=1 // pred_check
      _
    $region7: #{tpu_custom_call.1} parent=1 // pred_check_branch
      %19 = sbr.rel (0) target = $region9
    $region8: #{tpu_custom_call.1} parent=1 // pred_region
      %20 = dma.done [#allocation3], 32
    $region9: #{tpu_custom_call.1} parent=1 // pred_fallthru
      _
    %v21 = vld [vmem:[#allocation2] sm:$0x3]
    %v23 = vlaneseq
    %v24 = vshrl.u32 %v23, 7
    %v25 = vsub.s32 0, %v24
    %v26 = vrot.slane %v21, %v25
    %v27 = vlaneseq
    %v28 = vshrl.u32 %v27, 7
    %v29 = vsub.s32 1, %v28
    %v30 = vrot.slane %v21, %v29
    %v31 = vcombine.low %v26, %v30
    %v33 = vunpack.c.l.s4 1983009808
    %v34 = vunpack.c.0.s8 %v33
    %v35 = vlaneseq
    %v36 = vshrl.u32 %v35, 7
    %v37 = vsub.s32 %v34, %v36
    %v38 = vrot.slane %v31, %v37
    %40 = vst [vmem:[#allocation5] sm:$0xf] %v38
    // Predicated region
    $region10: #{tpu_custom_call.1} parent=1 // pred_check
      _
    $region11: #{tpu_custom_call.1} parent=1 // pred_check_branch
      %42 = sbr.rel (0) target = $region13
    $region12: #{tpu_custom_call.1} parent=1 // pred_region
      %s44 = ssub.s32 64, 64
      %45 = vsyncadd [#allocation4], %s44
      %s47 = sshll.u32 [#allocation5], 4
      %s48 = int_to_ptr.vmem [resolvable:$true] %s47
      %50 = dma.vmem_to_hbm [thread:$0]  %s48, 64, %s1, [#allocation4]
    $region13: #{tpu_custom_call.1} parent=1 // pred_fallthru
      _
    // Predicated region
    $region14: #{tpu_custom_call.1} parent=1 // pred_check
      _
    $region15: #{tpu_custom_call.1} parent=1 // pred_check_branch
      %52 = sbr.rel (0) target = $region17
    $region16: #{tpu_custom_call.1} parent=1 // pred_region
      %53 = dma.done [#allocation4], 64
    $region17: #{tpu_custom_call.1} parent=1 // pred_fallthru
      _
    %54 = vsyncpa [#allocation3], 1
    %55 = vsyncpa [#allocation4], 1

</llo_original>
